<compile_context>
chip_gen: v7x
topology: tpu7x:2x2x1
jax: 0.10.0
libtpu: 0.0.40
codegen_flags: <defaults>
</compile_context>

<pallas_src>
import math

import jax
import jax.numpy as jnp
from jax.experimental import pallas as pl
from jax.experimental.pallas import tpu as pltpu

LANE = 128


def mlp4_kernel(x_ref, w1_ref, b1_ref, w2_ref, b2_ref, w3_ref, b3_ref, o_ref):
    # fc1: Linear(D, H1) + Sigmoid.  bf16 inputs, f32 accumulation on the MXU.
    h1 = jnp.dot(x_ref[...], w1_ref[...], preferred_element_type=jnp.float32)
    h1 = jax.nn.sigmoid(h1 + b1_ref[...])
    # fc2: Linear(H1, H2) + Sigmoid.  Cast back to bf16 for the MXU fast path.
    h2 = jnp.dot(h1.astype(w2_ref.dtype), w2_ref[...],
                 preferred_element_type=jnp.float32)
    h2 = jax.nn.sigmoid(h2 + b2_ref[...])
    # fc3: Linear(H2, Kp) (no activation).  Kp is lane-padded to 128 so this
    # store is a full-lane vst rather than a masked partial store.
    out = jnp.dot(h2.astype(w3_ref.dtype), w3_ref[...],
                  preferred_element_type=jnp.float32) + b3_ref[...]
    o_ref[...] = out.astype(o_ref.dtype)


def _round_up(x, m):
    return (x + m - 1) // m * m


def _pick_batch_tile(B, D):
    """Return (batch_tile, padded_B).

    Picks the largest 8-aligned tile that (a) divides the (8-padded) batch,
    (b) leaves a grid of >= 2 steps (keeps both v7x TensorCores busy and lets
    the x tiles pipeline), and (c) keeps the double-buffered bf16 x tile under
    ~8 MiB of VMEM.  Small batches fall back to a single full-batch tile."""
    if B <= 8:
        return B, B
    Bp = _round_up(B, 8)
    # VMEM budget for the x input: 2 buffers * tile * D * 2 bytes <= 8 MiB.
    max_tile_vmem = max(8, (8 * 1024 * 1024) // max(1, 4 * D))
    for t in (1024, 512, 256, 128, 64, 32, 16, 8):
        if t <= max_tile_vmem and 2 * t <= Bp and Bp % t == 0:
            return t, Bp
    return Bp, Bp


def mlp4_forward(x_nchw, params, *, batch_tile=None):
    """x_nchw: (B, ...) float32. params: dict with transposed (in, out) weights."""
    B = x_nchw.shape[0]
    D = math.prod(x_nchw.shape[1:])          # static Python int (safe under jit)
    # nn.Flatten equivalent + bf16 stream for the dominant HBM read.
    x = x_nchw.reshape(B, D).astype(jnp.bfloat16)

    w1 = params["w1"].astype(jnp.bfloat16)   # (D, H1)
    w2 = params["w2"].astype(jnp.bfloat16)   # (H1, H2)
    w3 = params["w3"].astype(jnp.bfloat16)   # (H2, K)
    b1 = params["b1"].astype(jnp.float32)    # (1, H1)
    b2 = params["b2"].astype(jnp.float32)    # (1, H2)
    b3 = params["b3"].astype(jnp.float32)    # (1, K)
    H1, H2, K = w1.shape[1], w2.shape[1], w3.shape[1]

    # Lane-dense output: pad K up to a multiple of 128 (zero columns contribute
    # nothing and are sliced off after the call).
    Kp = _round_up(K, LANE)
    if Kp != K:
        w3 = jnp.pad(w3, ((0, 0), (0, Kp - K)))
        b3 = jnp.pad(b3, ((0, 0), (0, Kp - K)))

    # Batch tiling: pad B to a multiple of 8 if needed so every tile is
    # sublane-aligned; padded rows produce garbage that is sliced off.
    if batch_tile is None:
        batch_tile, Bp = _pick_batch_tile(B, D)
    else:
        Bp = _round_up(B, batch_tile)
    if Bp != B:
        x = jnp.pad(x, ((0, Bp - B), (0, 0)))
    assert Bp % batch_tile == 0
    grid = (Bp // batch_tile,)

    # Batch axis is tiled; weights/biases use a constant block index so Mosaic
    # keeps them VMEM-resident across grid steps (no re-DMA).
    in_specs = [
        pl.BlockSpec((batch_tile, D), lambda i: (i, 0)),
        pl.BlockSpec((D, H1), lambda i: (0, 0)),
        pl.BlockSpec((1, H1), lambda i: (0, 0)),
        pl.BlockSpec((H1, H2), lambda i: (0, 0)),
        pl.BlockSpec((1, H2), lambda i: (0, 0)),
        pl.BlockSpec((H2, Kp), lambda i: (0, 0)),
        pl.BlockSpec((1, Kp), lambda i: (0, 0)),
    ]
    out_specs = pl.BlockSpec((batch_tile, Kp), lambda i: (i, 0))

    # Advisory cost estimate so XLA schedules surrounding ops sensibly.
    flops = 2 * Bp * (D * H1 + H1 * H2 + H2 * Kp)
    transcendentals = Bp * (H1 + H2)
    bytes_accessed = (
        Bp * D * 2                                  # bf16 x stream
        + (w1.size + w2.size + w3.size) * 2         # bf16 weights
        + (b1.size + b2.size + b3.size) * 4         # f32 biases
        + Bp * Kp * 4)                              # f32 output

    out = pl.pallas_call(
        mlp4_kernel,
        out_shape=jax.ShapeDtypeStruct((Bp, Kp), jnp.float32),
        grid_spec=pltpu.PrefetchScalarGridSpec(
            num_scalar_prefetch=0,
            grid=grid,
            in_specs=in_specs,
            out_specs=out_specs,
        ),
        compiler_params=pltpu.CompilerParams(
            dimension_semantics=("parallel",),
            # 32 MiB comfortably holds the double-buffered bf16 x tiles
            # (tile picker caps them at ~8 MiB) plus all resident weight
            # buffers on every generation (v7x physical VMEM is only 64 MiB).
            vmem_limit_bytes=32 * 1024 * 1024,
        ),
        cost_estimate=pl.CostEstimate(
            flops=flops,
            transcendentals=transcendentals,
            bytes_accessed=bytes_accessed,
        ),
    )(x, w1, b1, w2, b2, w3, b3)

    if Bp != B or Kp != K:
        out = out[:B, :K]
    return out


def init_params(key, D, H1, H2, K):
    """Deterministic init (matches nn.Linear default uniform bounds).
    Weights stored transposed: (in, out)."""
    ks = jax.random.split(key, 6)
    s1 = 1.0 / math.sqrt(D)
    s2 = 1.0 / math.sqrt(H1)
    s3 = 1.0 / math.sqrt(H2)
    return {
        "w1": jax.random.uniform(ks[0], (D, H1), jnp.float32, -s1, s1),
        "b1": jax.random.uniform(ks[1], (1, H1), jnp.float32, -s1, s1),
        "w2": jax.random.uniform(ks[2], (H1, H2), jnp.float32, -s2, s2),
        "b2": jax.random.uniform(ks[3], (1, H2), jnp.float32, -s2, s2),
        "w3": jax.random.uniform(ks[4], (H2, K), jnp.float32, -s3, s3),
        "b3": jax.random.uniform(ks[5], (1, K), jnp.float32, -s3, s3),
    }


def mlp4_reference(x_nchw, params):
    """Pure-JAX f32 reference for correctness check."""
    B = x_nchw.shape[0]
    x = x_nchw.reshape(B, -1)
    h1 = jax.nn.sigmoid(x @ params["w1"] + params["b1"])
    h2 = jax.nn.sigmoid(h1 @ params["w2"] + params["b2"])
    return h2 @ params["w3"] + params["b3"]


if __name__ == "__main__":
    key = jax.random.PRNGKey(0)
    kx, kp = jax.random.split(key)

    # Small shapes: B=2, C=4, H=W=16 -> D = 4*16*16 = 1024
    B, C, Hs, Ws = 2, 4, 16, 16
    D = C * Hs * Ws
    H1, H2, K = 64, 32, 16

    x = jax.random.normal(kx, (B, C, Hs, Ws), jnp.float32)
    params = init_params(kp, D, H1, H2, K)

    out = mlp4_forward(x, params)
    out = jax.block_until_ready(out)

    ref = mlp4_reference(x, params)
    assert out.shape == (B, K)
    # bf16 input/weight stream -> compare against f32 reference with bf16-level tolerance.
    assert jnp.allclose(out, ref, atol=2e-2, rtol=2e-2), (
        f"max abs diff {jnp.max(jnp.abs(out - ref))}")

    print("KERNEL_OK")
</pallas_src>

<mosaic_0001>
module attributes {stable_mosaic.version = 11 : i64} {
  func.func @mlp4_kernel(%arg0: i32, %arg1: memref<2x1024xbf16, #tpu.memory_space<vmem>>, %arg2: memref<1024x64xbf16, #tpu.memory_space<vmem>>, %arg3: memref<1x64xf32, #tpu.memory_space<vmem>>, %arg4: memref<64x32xbf16, #tpu.memory_space<vmem>>, %arg5: memref<1x32xf32, #tpu.memory_space<vmem>>, %arg6: memref<32x128xbf16, #tpu.memory_space<vmem>>, %arg7: memref<1x128xf32, #tpu.memory_space<vmem>>, %arg8: memref<2x128xf32, #tpu.memory_space<vmem>>) attributes {dimension_semantics = [#tpu.dimension_semantics<parallel>], iteration_bounds = array<i64: 1>, scalar_prefetch = 0 : i64, scratch_operands = 0 : i64, tpu.core_type = #tpu.core_type<tc>, window_params = [{transform_indices = @transform_0, window_bounds = array<i64: 2, 1024>}, {pipeline_mode = #tpu.pipeline_mode<synchronous>, transform_indices = @transform_1, window_bounds = array<i64: 1024, 64>}, {pipeline_mode = #tpu.pipeline_mode<synchronous>, transform_indices = @transform_2, window_bounds = array<i64: 1, 64>}, {pipeline_mode = #tpu.pipeline_mode<synchronous>, transform_indices = @transform_3, window_bounds = array<i64: 64, 32>}, {pipeline_mode = #tpu.pipeline_mode<synchronous>, transform_indices = @transform_4, window_bounds = array<i64: 1, 32>}, {pipeline_mode = #tpu.pipeline_mode<synchronous>, transform_indices = @transform_5, window_bounds = array<i64: 32, 128>}, {pipeline_mode = #tpu.pipeline_mode<synchronous>, transform_indices = @transform_6, window_bounds = array<i64: 1, 128>}, {transform_indices = @transform_7, window_bounds = array<i64: 2, 128>}]} {
    %c0 = arith.constant 0 : index
    %c0_0 = arith.constant 0 : index
    %0 = vector.load %arg1[%c0, %c0_0] : memref<2x1024xbf16, #tpu.memory_space<vmem>>, vector<2x1024xbf16>
    %c0_1 = arith.constant 0 : index
    %c0_2 = arith.constant 0 : index
    %1 = vector.load %arg2[%c0_1, %c0_2] : memref<1024x64xbf16, #tpu.memory_space<vmem>>, vector<1024x64xbf16>
    %cst = arith.constant dense<0.000000e+00> : vector<2x64xf32>
    %2 = tpu.matmul %0, %1, %cst {dimension_numbers = #tpu.dot_dimension_numbers<[1], [0], [0], [1], [0, 0, 1, 1], [], []>} : vector<2x1024xbf16>, vector<1024x64xbf16>, vector<2x64xf32> -> vector<2x64xf32>
    %c0_3 = arith.constant 0 : index
    %c0_4 = arith.constant 0 : index
    %3 = vector.load %arg3[%c0_3, %c0_4] : memref<1x64xf32, #tpu.memory_space<vmem>>, vector<1x64xf32>
    %4 = vector.broadcast %3 : vector<1x64xf32> to vector<2x64xf32>
    %5 = arith.addf %2, %4 : vector<2x64xf32>
    %6 = arith.negf %5 : vector<2x64xf32>
    %7 = math.exp %6 : vector<2x64xf32>
    %cst_5 = arith.constant 1.000000e+00 : f32
    %8 = vector.broadcast %cst_5 : f32 to vector<2x64xf32>
    %9 = arith.addf %8, %7 : vector<2x64xf32>
    %10 = arith.divf %8, %9 : vector<2x64xf32>
    %11 = arith.truncf %10 : vector<2x64xf32> to vector<2x64xbf16>
    %c0_6 = arith.constant 0 : index
    %c0_7 = arith.constant 0 : index
    %12 = vector.load %arg4[%c0_6, %c0_7] : memref<64x32xbf16, #tpu.memory_space<vmem>>, vector<64x32xbf16>
    %cst_8 = arith.constant dense<0.000000e+00> : vector<2x32xf32>
    %13 = tpu.matmul %11, %12, %cst_8 {dimension_numbers = #tpu.dot_dimension_numbers<[1], [0], [0], [1], [0, 0, 1, 1], [], []>} : vector<2x64xbf16>, vector<64x32xbf16>, vector<2x32xf32> -> vector<2x32xf32>
    %c0_9 = arith.constant 0 : index
    %c0_10 = arith.constant 0 : index
    %14 = vector.load %arg5[%c0_9, %c0_10] : memref<1x32xf32, #tpu.memory_space<vmem>>, vector<1x32xf32>
    %15 = vector.broadcast %14 : vector<1x32xf32> to vector<2x32xf32>
    %16 = arith.addf %13, %15 : vector<2x32xf32>
    %17 = arith.negf %16 : vector<2x32xf32>
    %18 = math.exp %17 : vector<2x32xf32>
    %cst_11 = arith.constant 1.000000e+00 : f32
    %19 = vector.broadcast %cst_11 : f32 to vector<2x32xf32>
    %20 = arith.addf %19, %18 : vector<2x32xf32>
    %21 = arith.divf %19, %20 : vector<2x32xf32>
    %22 = arith.truncf %21 : vector<2x32xf32> to vector<2x32xbf16>
    %c0_12 = arith.constant 0 : index
    %c0_13 = arith.constant 0 : index
    %23 = vector.load %arg6[%c0_12, %c0_13] : memref<32x128xbf16, #tpu.memory_space<vmem>>, vector<32x128xbf16>
    %cst_14 = arith.constant dense<0.000000e+00> : vector<2x128xf32>
    %24 = tpu.matmul %22, %23, %cst_14 {dimension_numbers = #tpu.dot_dimension_numbers<[1], [0], [0], [1], [0, 0, 1, 1], [], []>} : vector<2x32xbf16>, vector<32x128xbf16>, vector<2x128xf32> -> vector<2x128xf32>
    %c0_15 = arith.constant 0 : index
    %c0_16 = arith.constant 0 : index
    %25 = vector.load %arg7[%c0_15, %c0_16] : memref<1x128xf32, #tpu.memory_space<vmem>>, vector<1x128xf32>
    %26 = vector.broadcast %25 : vector<1x128xf32> to vector<2x128xf32>
    %27 = arith.addf %24, %26 : vector<2x128xf32>
    %c0_17 = arith.constant 0 : index
    %c0_18 = arith.constant 0 : index
    %28 = vector.load %arg8[%c0_17, %c0_18] : memref<2x128xf32, #tpu.memory_space<vmem>>, vector<2x128xf32>
    tpu.vector_store %arg8[%c0_17, %c0_18], %27 {strides = array<i32>} : memref<2x128xf32, #tpu.memory_space<vmem>>, vector<2x128xf32>,
    return
  }
  func.func @transform_0(%arg0: i32) -> (i32, i32) {
    %c0_i32 = arith.constant 0 : i32
    %c0_i32_0 = arith.constant 0 : i32
    return %arg0, %c0_i32 : i32, i32
  }
  func.func @transform_1(%arg0: i32) -> (i32, i32) {
    %c0_i32 = arith.constant 0 : i32
    %c0_i32_0 = arith.constant 0 : i32
    %c0_i32_1 = arith.constant 0 : i32
    return %c0_i32, %c0_i32_0 : i32, i32
  }
  func.func @transform_2(%arg0: i32) -> (i32, i32) {
    %c0_i32 = arith.constant 0 : i32
    %c0_i32_0 = arith.constant 0 : i32
    %c0_i32_1 = arith.constant 0 : i32
    return %c0_i32, %c0_i32_0 : i32, i32
  }
  func.func @transform_3(%arg0: i32) -> (i32, i32) {
    %c0_i32 = arith.constant 0 : i32
    %c0_i32_0 = arith.constant 0 : i32
    %c0_i32_1 = arith.constant 0 : i32
    return %c0_i32, %c0_i32_0 : i32, i32
  }
  func.func @transform_4(%arg0: i32) -> (i32, i32) {
    %c0_i32 = arith.constant 0 : i32
    %c0_i32_0 = arith.constant 0 : i32
    %c0_i32_1 = arith.constant 0 : i32
    return %c0_i32, %c0_i32_0 : i32, i32
  }
  func.func @transform_5(%arg0: i32) -> (i32, i32) {
    %c0_i32 = arith.constant 0 : i32
    %c0_i32_0 = arith.constant 0 : i32
    %c0_i32_1 = arith.constant 0 : i32
    return %c0_i32, %c0_i32_0 : i32, i32
  }
  func.func @transform_6(%arg0: i32) -> (i32, i32) {
    %c0_i32 = arith.constant 0 : i32
    %c0_i32_0 = arith.constant 0 : i32
    %c0_i32_1 = arith.constant 0 : i32
    return %c0_i32, %c0_i32_0 : i32, i32
  }
  func.func @transform_7(%arg0: i32) -> (i32, i32) {
    %c0_i32 = arith.constant 0 : i32
    %c0_i32_0 = arith.constant 0 : i32
    return %arg0, %c0_i32 : i32, i32
  }
}

</mosaic_0001>

<llo_original>
// kernel: tpu_custom_call.1
$region0: #{tpu_custom_call.1}
  #allocation0 [shape = 'u32[]', space=smem, size = 0x4, offset = 0x4, fixed_abs, tag = 'smem constant byte address 0x4 - core index']
  #allocation1 [shape = 'u32[144,128]{1,0:T(1,128)}', space=vmem, size = 0x12000, scoped, tag = 'internal scratch']
  %s0 = inlined_call_operand.vmem [shape: bf16[2,1024], index: 0, kind: input, shape index: {}]
  %s1 = inlined_call_operand.vmem [shape: bf16[1024,64], index: 1, kind: input, shape index: {}]
  %s2 = inlined_call_operand.vmem [shape: f32[1,64], index: 2, kind: input, shape index: {}]
  %s3 = inlined_call_operand.vmem [shape: bf16[64,32], index: 3, kind: input, shape index: {}]
  %s4 = inlined_call_operand.vmem [shape: f32[1,32], index: 4, kind: input, shape index: {}]
  %s5 = inlined_call_operand.vmem [shape: bf16[32,128], index: 5, kind: input, shape index: {}]
  %s6 = inlined_call_operand.vmem [shape: f32[1,128], index: 6, kind: input, shape index: {}]
  %s7 = inlined_call_operand.hbm [shape: f32[2,128], index: 7, kind: output, shape index: {}]
  %s8 = sld [smem:[#allocation0]]
  $region38: #{tpu_custom_call.1} parent=0
    _
  %s10 = ssub.s32 1, %s8
  %s11 = scalar_select 0, %s10, %s8
  $region1: #{tpu_custom_call.1} parent=0
    #allocation2 [shape = 'u8[1024]{0}', space=vmem, size = 0x400, scoped, tag = 'output window, operand 0, single buffered']
    #allocation3 [shape = 's32[1]{0}', space=sflag, size = 0x4, scoped, tag = 'scoped memory for tpu_custom_call.1']
    %12 = vsyncpa [#allocation3], 0
    // Predicated region
    $region2: #{tpu_custom_call.1} parent=1 // pred_check
      _
    $region3: #{tpu_custom_call.1} parent=1 // pred_check_branch
      %14 = sbr.rel (0) target = $region5
    $region4: #{tpu_custom_call.1} parent=1 // pred_region
      _
    $region5: #{tpu_custom_call.1} parent=1 // pred_fallthru
      _
    // Predicated region
    $region6: #{tpu_custom_call.1} parent=1 // pred_check
      _
    $region7: #{tpu_custom_call.1} parent=1 // pred_check_branch
      %16 = sbr.rel (0) target = $region9
    $region8: #{tpu_custom_call.1} parent=1 // pred_region
      _
    $region9: #{tpu_custom_call.1} parent=1 // pred_fallthru
      _
    // Predicated region
    $region10: #{tpu_custom_call.1} parent=1 // pred_check
      _
    $region11: #{tpu_custom_call.1} parent=1 // pred_check_branch
      %18 = sbr.rel (0) target = $region13
    $region12: #{tpu_custom_call.1} parent=1 // pred_region
      _
    $region13: #{tpu_custom_call.1} parent=1 // pred_fallthru
      _
    // Predicated region
    $region14: #{tpu_custom_call.1} parent=1 // pred_check
      _
    $region15: #{tpu_custom_call.1} parent=1 // pred_check_branch
      %20 = sbr.rel (0) target = $region17
    $region16: #{tpu_custom_call.1} parent=1 // pred_region
      _
    $region17: #{tpu_custom_call.1} parent=1 // pred_fallthru
      _
    // Predicated region
    $region18: #{tpu_custom_call.1} parent=1 // pred_check
      _
    $region19: #{tpu_custom_call.1} parent=1 // pred_check_branch
      %22 = sbr.rel (0) target = $region21
    $region20: #{tpu_custom_call.1} parent=1 // pred_region
      _
    $region21: #{tpu_custom_call.1} parent=1 // pred_fallthru
      _
    // Predicated region
    $region22: #{tpu_custom_call.1} parent=1 // pred_check
      _
    $region23: #{tpu_custom_call.1} parent=1 // pred_check_branch
      %24 = sbr.rel (0) target = $region25
    $region24: #{tpu_custom_call.1} parent=1 // pred_region
      _
    $region25: #{tpu_custom_call.1} parent=1 // pred_fallthru
      _
    // Predicated region
    $region26: #{tpu_custom_call.1} parent=1 // pred_check
      _
    $region27: #{tpu_custom_call.1} parent=1 // pred_check_branch
      %26 = sbr.rel (0) target = $region29
    $region28: #{tpu_custom_call.1} parent=1 // pred_region
      _
    $region29: #{tpu_custom_call.1} parent=1 // pred_fallthru
      _
    %v28 = vld [vmem:[%s0] sm:$0xff]
    %v29 = vld [vmem:[%s1] sm:$0xf]
    %v30 = vld [vmem:[%s1 + $0x4] sm:$0xf]
    %v31 = vld [vmem:[%s1 + $0x8] sm:$0xf]
    %v32 = vld [vmem:[%s1 + $0xc] sm:$0xf]
    %v33 = vld [vmem:[%s1 + $0x10] sm:$0xf]
    %v34 = vld [vmem:[%s1 + $0x14] sm:$0xf]
    %v35 = vld [vmem:[%s1 + $0x18] sm:$0xf]
    %v36 = vld [vmem:[%s1 + $0x1c] sm:$0xf]
    %v37 = vld [vmem:[%s1 + $0x20] sm:$0xf]
    %v38 = vld [vmem:[%s1 + $0x24] sm:$0xf]
    %v39 = vld [vmem:[%s1 + $0x28] sm:$0xf]
    %v40 = vld [vmem:[%s1 + $0x2c] sm:$0xf]
    %v41 = vld [vmem:[%s1 + $0x30] sm:$0xf]
    %v42 = vld [vmem:[%s1 + $0x34] sm:$0xf]
    %v43 = vld [vmem:[%s1 + $0x38] sm:$0xf]
    %v44 = vld [vmem:[%s1 + $0x3c] sm:$0xf]
    %v45 = vld [vmem:[%s1 + $0x40] sm:$0xf]
    %v46 = vld [vmem:[%s1 + $0x44] sm:$0xf]
    %v47 = vld [vmem:[%s1 + $0x48] sm:$0xf]
    %v48 = vld [vmem:[%s1 + $0x4c] sm:$0xf]
    %v49 = vld [vmem:[%s1 + $0x50] sm:$0xf]
    %v50 = vld [vmem:[%s1 + $0x54] sm:$0xf]
    %v51 = vld [vmem:[%s1 + $0x58] sm:$0xf]
    %v52 = vld [vmem:[%s1 + $0x5c] sm:$0xf]
    %v53 = vld [vmem:[%s1 + $0x60] sm:$0xf]
    %v54 = vld [vmem:[%s1 + $0x64] sm:$0xf]
    %v55 = vld [vmem:[%s1 + $0x68] sm:$0xf]
    %v56 = vld [vmem:[%s1 + $0x6c] sm:$0xf]
    %v57 = vld [vmem:[%s1 + $0x70] sm:$0xf]
    %v58 = vld [vmem:[%s1 + $0x74] sm:$0xf]
    %v59 = vld [vmem:[%s1 + $0x78] sm:$0xf]
    %v60 = vld [vmem:[%s1 + $0x7c] sm:$0xf]
    %v61 = vld [vmem:[%s1 + $0x80] sm:$0xf]
    %v62 = vld [vmem:[%s1 + $0x84] sm:$0xf]
    %v63 = vld [vmem:[%s1 + $0x88] sm:$0xf]
    %v64 = vld [vmem:[%s1 + $0x8c] sm:$0xf]
    %v65 = vld [vmem:[%s1 + $0x90] sm:$0xf]
    %v66 = vld [vmem:[%s1 + $0x94] sm:$0xf]
    %v67 = vld [vmem:[%s1 + $0x98] sm:$0xf]
    %v68 = vld [vmem:[%s1 + $0x9c] sm:$0xf]
    %v69 = vld [vmem:[%s1 + $0xa0] sm:$0xf]
    %v70 = vld [vmem:[%s1 + $0xa4] sm:$0xf]
    %v71 = vld [vmem:[%s1 + $0xa8] sm:$0xf]
    %v72 = vld [vmem:[%s1 + $0xac] sm:$0xf]
    %v73 = vld [vmem:[%s1 + $0xb0] sm:$0xf]
    %v74 = vld [vmem:[%s1 + $0xb4] sm:$0xf]
    %v75 = vld [vmem:[%s1 + $0xb8] sm:$0xf]
    %v76 = vld [vmem:[%s1 + $0xbc] sm:$0xf]
    %v77 = vld [vmem:[%s1 + $0xc0] sm:$0xf]
    %v78 = vld [vmem:[%s1 + $0xc4] sm:$0xf]
    %v79 = vld [vmem:[%s1 + $0xc8] sm:$0xf]
    %v80 = vld [vmem:[%s1 + $0xcc] sm:$0xf]
    %v81 = vld [vmem:[%s1 + $0xd0] sm:$0xf]
    %v82 = vld [vmem:[%s1 + $0xd4] sm:$0xf]
    %v83 = vld [vmem:[%s1 + $0xd8] sm:$0xf]
    %v84 = vld [vmem:[%s1 + $0xdc] sm:$0xf]
    %v85 = vld [vmem:[%s1 + $0xe0] sm:$0xf]
    %v86 = vld [vmem:[%s1 + $0xe4] sm:$0xf]
    %v87 = vld [vmem:[%s1 + $0xe8] sm:$0xf]
    %v88 = vld [vmem:[%s1 + $0xec] sm:$0xf]
    %v89 = vld [vmem:[%s1 + $0xf0] sm:$0xf]
    %v90 = vld [vmem:[%s1 + $0xf4] sm:$0xf]
    %v91 = vld [vmem:[%s1 + $0xf8] sm:$0xf]
    %v92 = vld [vmem:[%s1 + $0xfc] sm:$0xf]
    %v93 = vld [vmem:[%s1 + $0x100] sm:$0xf]
    %v94 = vld [vmem:[%s1 + $0x104] sm:$0xf]
    %v95 = vld [vmem:[%s1 + $0x108] sm:$0xf]
    %v96 = vld [vmem:[%s1 + $0x10c] sm:$0xf]
    %v97 = vld [vmem:[%s1 + $0x110] sm:$0xf]
    %v98 = vld [vmem:[%s1 + $0x114] sm:$0xf]
    %v99 = vld [vmem:[%s1 + $0x118] sm:$0xf]
    %v100 = vld [vmem:[%s1 + $0x11c] sm:$0xf]
    %v101 = vld [vmem:[%s1 + $0x120] sm:$0xf]
    %v102 = vld [vmem:[%s1 + $0x124] sm:$0xf]
    %v103 = vld [vmem:[%s1 + $0x128] sm:$0xf]
    %v104 = vld [vmem:[%s1 + $0x12c] sm:$0xf]
    %v105 = vld [vmem:[%s1 + $0x130] sm:$0xf]
    %v106 = vld [vmem:[%s1 + $0x134] sm:$0xf]
    %v107 = vld [vmem:[%s1 + $0x138] sm:$0xf]
    %v108 = vld [vmem:[%s1 + $0x13c] sm:$0xf]
    %v109 = vld [vmem:[%s1 + $0x140] sm:$0xf]
    %v110 = vld [vmem:[%s1 + $0x144] sm:$0xf]
    %v111 = vld [vmem:[%s1 + $0x148] sm:$0xf]
    %v112 = vld [vmem:[%s1 + $0x14c] sm:$0xf]
    %v113 = vld [vmem:[%s1 + $0x150] sm:$0xf]
    %v114 = vld [vmem:[%s1 + $0x154] sm:$0xf]
    %v115 = vld [vmem:[%s1 + $0x158] sm:$0xf]
    %v116 = vld [vmem:[%s1 + $0x15c] sm:$0xf]
    %v117 = vld [vmem:[%s1 + $0x160] sm:$0xf]
    %v118 = vld [vmem:[%s1 + $0x164] sm:$0xf]
    %v119 = vld [vmem:[%s1 + $0x168] sm:$0xf]
    %v120 = vld [vmem:[%s1 + $0x16c] sm:$0xf]
    %v121 = vld [vmem:[%s1 + $0x170] sm:$0xf]
    %v122 = vld [vmem:[%s1 + $0x174] sm:$0xf]
    %v123 = vld [vmem:[%s1 + $0x178] sm:$0xf]
    %v124 = vld [vmem:[%s1 + $0x17c] sm:$0xf]
    %v125 = vld [vmem:[%s1 + $0x180] sm:$0xf]
    %v126 = vld [vmem:[%s1 + $0x184] sm:$0xf]
    %v127 = vld [vmem:[%s1 + $0x188] sm:$0xf]
    %v128 = vld [vmem:[%s1 + $0x18c] sm:$0xf]
    %v129 = vld [vmem:[%s1 + $0x190] sm:$0xf]
    %v130 = vld [vmem:[%s1 + $0x194] sm:$0xf]
    %v131 = vld [vmem:[%s1 + $0x198] sm:$0xf]
    %v132 = vld [vmem:[%s1 + $0x19c] sm:$0xf]
    %v133 = vld [vmem:[%s1 + $0x1a0] sm:$0xf]
    %v134 = vld [vmem:[%s1 + $0x1a4] sm:$0xf]
    %v135 = vld [vmem:[%s1 + $0x1a8] sm:$0xf]
    %v136 = vld [vmem:[%s1 + $0x1ac] sm:$0xf]
    %v137 = vld [vmem:[%s1 + $0x1b0] sm:$0xf]
    %v138 = vld [vmem:[%s1 + $0x1b4] sm:$0xf]
    %v139 = vld [vmem:[%s1 + $0x1b8] sm:$0xf]
    %v140 = vld [vmem:[%s1 + $0x1bc] sm:$0xf]
    %v141 = vld [vmem:[%s1 + $0x1c0] sm:$0xf]
    %v142 = vld [vmem:[%s1 + $0x1c4] sm:$0xf]
    %v143 = vld [vmem:[%s1 + $0x1c8] sm:$0xf]
    %v144 = vld [vmem:[%s1 + $0x1cc] sm:$0xf]
    %v145 = vld [vmem:[%s1 + $0x1d0] sm:$0xf]
    %v146 = vld [vmem:[%s1 + $0x1d4] sm:$0xf]
    %v147 = vld [vmem:[%s1 + $0x1d8] sm:$0xf]
    %v148 = vld [vmem:[%s1 + $0x1dc] sm:$0xf]
    %v149 = vld [vmem:[%s1 + $0x1e0] sm:$0xf]
    %v150 = vld [vmem:[%s1 + $0x1e4] sm:$0xf]
    %v151 = vld [vmem:[%s1 + $0x1e8] sm:$0xf]
    %v152 = vld [vmem:[%s1 + $0x1ec] sm:$0xf]
    %v153 = vld [vmem:[%s1 + $0x1f0] sm:$0xf]
    %v154 = vld [vmem:[%s1 + $0x1f4] sm:$0xf]
    %v155 = vld [vmem:[%s1 + $0x1f8] sm:$0xf]
    %v156 = vld [vmem:[%s1 + $0x1fc] sm:$0xf]
    %v157 = vld [vmem:[%s2] sm:$0x1]
    %v159 = vlaneseq
    %v160 = vshrl.u32 %v159, 7
    %v161 = vsub.s32 0, %v160
    %v162 = vrot.slane %v157, %v161
    %v165 = vcombine.high %v28, %v28
    %v167 = vunpack.c.l.s4 1966171168
    %v168 = vunpack.c.0.s8 %v167
    %v169 = vlaneseq
    %v170 = vshrl.u32 %v169, 7
    %v171 = vsub.s32 %v168, %v170
    %v172 = vrot.slane %v28, %v171
    %v174 = vunpack.c.l.s4 1966171168
    %v175 = vunpack.c.0.s8 %v174
    %v176 = vlaneseq
    %v177 = vshrl.u32 %v176, 7
    %v178 = vsub.s32 %v175, %v177
    %v179 = vrot.slane %v165, %v178
    %v180 = vcombine.high %v172, %v172
    %v181 = vcombine.high %v179, %v179
    %v183 = vunpack.c.l.s4 1966171168
    %v184 = vunpack.c.0.s8 %v183
    %v185 = vlaneseq
    %v186 = vshrl.u32 %v185, 7
    %v187 = vsub.s32 %v184, %v186
    %v188 = vrot.slane %v172, %v187
    %v190 = vunpack.c.l.s4 1966171168
    %v191 = vunpack.c.0.s8 %v190
    %v192 = vlaneseq
    %v193 = vshrl.u32 %v192, 7
    %v194 = vsub.s32 %v191, %v193
    %v195 = vrot.slane %v179, %v194
    %v197 = vunpack.c.l.s4 1966171168
    %v198 = vunpack.c.0.s8 %v197
    %v199 = vlaneseq
    %v200 = vshrl.u32 %v199, 7
    %v201 = vsub.s32 %v198, %v200
    %v202 = vrot.slane %v180, %v201
    %v204 = vunpack.c.l.s4 1966171168
    %v205 = vunpack.c.0.s8 %v204
    %v206 = vlaneseq
    %v207 = vshrl.u32 %v206, 7
    %v208 = vsub.s32 %v205, %v207
    %v209 = vrot.slane %v181, %v208
    %v210 = vcombine.high %v188, %v188
    %v211 = vcombine.high %v195, %v195
    %v212 = vcombine.high %v202, %v202
    %v213 = vcombine.high %v209, %v209
    %v350 = vunpack.c.l.b16 %v29
    %v351 = vunpack.c.l.b16 %v30
    %v352 = vunpack.c.l.b16 %v31
    %v353 = vunpack.c.l.b16 %v32
    %v354 = vunpack.c.l.b16 %v33
    %v355 = vunpack.c.l.b16 %v34
    %v356 = vunpack.c.l.b16 %v35
    %v357 = vunpack.c.l.b16 %v36
    %v358 = vunpack.c.l.b16 %v37
    %v359 = vunpack.c.l.b16 %v38
    %v360 = vunpack.c.l.b16 %v39
    %v361 = vunpack.c.l.b16 %v40
    %v362 = vunpack.c.l.b16 %v41
    %v363 = vunpack.c.l.b16 %v42
    %v364 = vunpack.c.l.b16 %v43
    %v365 = vunpack.c.l.b16 %v44
    %v366 = vunpack.c.l.b16 %v45
    %v367 = vunpack.c.l.b16 %v46
    %v368 = vunpack.c.l.b16 %v47
    %v369 = vunpack.c.l.b16 %v48
    %v370 = vunpack.c.l.b16 %v49
    %v371 = vunpack.c.l.b16 %v50
    %v372 = vunpack.c.l.b16 %v51
    %v373 = vunpack.c.l.b16 %v52
    %v374 = vunpack.c.l.b16 %v53
    %v375 = vunpack.c.l.b16 %v54
    %v376 = vunpack.c.l.b16 %v55
    %v377 = vunpack.c.l.b16 %v56
    %v378 = vunpack.c.l.b16 %v57
    %v379 = vunpack.c.l.b16 %v58
    %v380 = vunpack.c.l.b16 %v59
    %v381 = vunpack.c.l.b16 %v60
    %v382 = vunpack.c.l.b16 %v61
    %v383 = vunpack.c.l.b16 %v62
    %v384 = vunpack.c.l.b16 %v63
    %v385 = vunpack.c.l.b16 %v64
    %v386 = vunpack.c.l.b16 %v65
    %v387 = vunpack.c.l.b16 %v66
    %v388 = vunpack.c.l.b16 %v67
    %v389 = vunpack.c.l.b16 %v68
    %v390 = vunpack.c.l.b16 %v69
    %v391 = vunpack.c.l.b16 %v70
    %v392 = vunpack.c.l.b16 %v71
    %v393 = vunpack.c.l.b16 %v72
    %v394 = vunpack.c.l.b16 %v73
    %v395 = vunpack.c.l.b16 %v74
    %v396 = vunpack.c.l.b16 %v75
    %v397 = vunpack.c.l.b16 %v76
    %v398 = vunpack.c.l.b16 %v77
    %v399 = vunpack.c.l.b16 %v78
    %v400 = vunpack.c.l.b16 %v79
    %v401 = vunpack.c.l.b16 %v80
    %v402 = vunpack.c.l.b16 %v81
    %v403 = vunpack.c.l.b16 %v82
    %v404 = vunpack.c.l.b16 %v83
    %v405 = vunpack.c.l.b16 %v84
    %v406 = vunpack.c.l.b16 %v85
    %v407 = vunpack.c.l.b16 %v86
    %v408 = vunpack.c.l.b16 %v87
    %v409 = vunpack.c.l.b16 %v88
    %v410 = vunpack.c.l.b16 %v89
    %v411 = vunpack.c.l.b16 %v90
    %v412 = vunpack.c.l.b16 %v91
    %v413 = vunpack.c.l.b16 %v92
    %v414 = vunpack.c.l.b16 %v93
    %v415 = vunpack.c.l.b16 %v94
    %v416 = vunpack.c.l.b16 %v95
    %v417 = vunpack.c.l.b16 %v96
    %v418 = vunpack.c.l.b16 %v97
    %v419 = vunpack.c.l.b16 %v98
    %v420 = vunpack.c.l.b16 %v99
    %v421 = vunpack.c.l.b16 %v100
    %v422 = vunpack.c.l.b16 %v101
    %v423 = vunpack.c.l.b16 %v102
    %v424 = vunpack.c.l.b16 %v103
    %v425 = vunpack.c.l.b16 %v104
    %v426 = vunpack.c.l.b16 %v105
    %v427 = vunpack.c.l.b16 %v106
    %v428 = vunpack.c.l.b16 %v107
    %v429 = vunpack.c.l.b16 %v108
    %v430 = vunpack.c.l.b16 %v109
    %v431 = vunpack.c.l.b16 %v110
    %v432 = vunpack.c.l.b16 %v111
    %v433 = vunpack.c.l.b16 %v112
    %v434 = vunpack.c.l.b16 %v113
    %v435 = vunpack.c.l.b16 %v114
    %v436 = vunpack.c.l.b16 %v115
    %v437 = vunpack.c.l.b16 %v116
    %v438 = vunpack.c.l.b16 %v117
    %v439 = vunpack.c.l.b16 %v118
    %v440 = vunpack.c.l.b16 %v119
    %v441 = vunpack.c.l.b16 %v120
    %v442 = vunpack.c.l.b16 %v121
    %v443 = vunpack.c.l.b16 %v122
    %v444 = vunpack.c.l.b16 %v123
    %v445 = vunpack.c.l.b16 %v124
    %v446 = vunpack.c.l.b16 %v125
    %v447 = vunpack.c.l.b16 %v126
    %v448 = vunpack.c.l.b16 %v127
    %v449 = vunpack.c.l.b16 %v128
    %v450 = vunpack.c.l.b16 %v129
    %v451 = vunpack.c.l.b16 %v130
    %v452 = vunpack.c.l.b16 %v131
    %v453 = vunpack.c.l.b16 %v132
    %v454 = vunpack.c.l.b16 %v133
    %v455 = vunpack.c.l.b16 %v134
    %v456 = vunpack.c.l.b16 %v135
    %v457 = vunpack.c.l.b16 %v136
    %v458 = vunpack.c.l.b16 %v137
    %v459 = vunpack.c.l.b16 %v138
    %v460 = vunpack.c.l.b16 %v139
    %v461 = vunpack.c.l.b16 %v140
    %v462 = vunpack.c.l.b16 %v141
    %v463 = vunpack.c.l.b16 %v142
    %v464 = vunpack.c.l.b16 %v143
    %v465 = vunpack.c.l.b16 %v144
    %v466 = vunpack.c.l.b16 %v145
    %v467 = vunpack.c.l.b16 %v146
    %v468 = vunpack.c.l.b16 %v147
    %v469 = vunpack.c.l.b16 %v148
    %v470 = vunpack.c.l.b16 %v149
    %v471 = vunpack.c.l.b16 %v150
    %v472 = vunpack.c.l.b16 %v151
    %v473 = vunpack.c.l.b16 %v152
    %v474 = vunpack.c.l.b16 %v153
    %v475 = vunpack.c.l.b16 %v154
    %v476 = vunpack.c.l.b16 %v155
    %v477 = vunpack.c.l.b16 %v156
    %v478 = vpack.c.b16 %v351, %v350
    %v479 = vpack.c.b16 %v353, %v352
    %v480 = vpack.c.b16 %v355, %v354
    %v481 = vpack.c.b16 %v357, %v356
    %v482 = vpack.c.b16 %v359, %v358
    %v483 = vpack.c.b16 %v361, %v360
    %v484 = vpack.c.b16 %v363, %v362
    %v485 = vpack.c.b16 %v365, %v364
    %v486 = vpack.c.b16 %v367, %v366
    %v487 = vpack.c.b16 %v369, %v368
    %v488 = vpack.c.b16 %v371, %v370
    %v489 = vpack.c.b16 %v373, %v372
    %v490 = vpack.c.b16 %v375, %v374
    %v491 = vpack.c.b16 %v377, %v376
    %v492 = vpack.c.b16 %v379, %v378
    %v493 = vpack.c.b16 %v381, %v380
    %v494 = vpack.c.b16 %v383, %v382
    %v495 = vpack.c.b16 %v385, %v384
    %v496 = vpack.c.b16 %v387, %v386
    %v497 = vpack.c.b16 %v389, %v388
    %v498 = vpack.c.b16 %v391, %v390
    %v499 = vpack.c.b16 %v393, %v392
    %v500 = vpack.c.b16 %v395, %v394
    %v501 = vpack.c.b16 %v397, %v396
    %v502 = vpack.c.b16 %v399, %v398
    %v503 = vpack.c.b16 %v401, %v400
    %v504 = vpack.c.b16 %v403, %v402
    %v505 = vpack.c.b16 %v405, %v404
    %v506 = vpack.c.b16 %v407, %v406
    %v507 = vpack.c.b16 %v409, %v408
    %v508 = vpack.c.b16 %v411, %v410
    %v509 = vpack.c.b16 %v413, %v412
    %v510 = vpack.c.b16 %v415, %v414
    %v511 = vpack.c.b16 %v417, %v416
    %v512 = vpack.c.b16 %v419, %v418
    %v513 = vpack.c.b16 %v421, %v420
    %v514 = vpack.c.b16 %v423, %v422
    %v515 = vpack.c.b16 %v425, %v424
    %v516 = vpack.c.b16 %v427, %v426
    %v517 = vpack.c.b16 %v429, %v428
    %v518 = vpack.c.b16 %v431, %v430
    %v519 = vpack.c.b16 %v433, %v432
    %v520 = vpack.c.b16 %v435, %v434
    %v521 = vpack.c.b16 %v437, %v436
    %v522 = vpack.c.b16 %v439, %v438
    %v523 = vpack.c.b16 %v441, %v440
    %v524 = vpack.c.b16 %v443, %v442
    %v525 = vpack.c.b16 %v445, %v444
    %v526 = vpack.c.b16 %v447, %v446
    %v527 = vpack.c.b16 %v449, %v448
    %v528 = vpack.c.b16 %v451, %v450
    %v529 = vpack.c.b16 %v453, %v452
    %v530 = vpack.c.b16 %v455, %v454
    %v531 = vpack.c.b16 %v457, %v456
    %v532 = vpack.c.b16 %v459, %v458
    %v533 = vpack.c.b16 %v461, %v460
    %v534 = vpack.c.b16 %v463, %v462
    %v535 = vpack.c.b16 %v465, %v464
    %v536 = vpack.c.b16 %v467, %v466
    %v537 = vpack.c.b16 %v469, %v468
    %v538 = vpack.c.b16 %v471, %v470
    %v539 = vpack.c.b16 %v473, %v472
    %v540 = vpack.c.b16 %v475, %v474
    %v541 = vpack.c.b16 %v477, %v476
    %606 = vmatprep.subr.bf16.mxu0 0
    %607 = vmatpush1.bf16.msra.mxu0 %v478
    %608 = vmatprep.subr.bf16.mxu0 0
    %609 = vmatpush1.bf16.msra.mxu0 %v479
    %610 = vmatprep.subr.bf16.mxu0 0
    %611 = vmatpush1.bf16.msra.mxu0 %v480
    %612 = vmatprep.subr.bf16.mxu0 0
    %613 = vmatpush1.bf16.msra.mxu0 %v481
    %614 = vmatprep.subr.bf16.mxu0 0
    %615 = vmatpush1.bf16.msra.mxu0 %v482
    %616 = vmatprep.subr.bf16.mxu0 0
    %617 = vmatpush1.bf16.msra.mxu0 %v483
    %618 = vmatprep.subr.bf16.mxu0 0
    %619 = vmatpush1.bf16.msra.mxu0 %v484
    %620 = vmatprep.subr.bf16.mxu0 0
    %621 = vmatpush1.bf16.msra.mxu0 %v485
    %622 = vmatprep.subr.bf16.mxu0 0
    %623 = vmatpush1.bf16.msra.mxu0 %v486
    %624 = vmatprep.subr.bf16.mxu0 0
    %625 = vmatpush1.bf16.msra.mxu0 %v487
    %626 = vmatprep.subr.bf16.mxu0 0
    %627 = vmatpush1.bf16.msra.mxu0 %v488
    %628 = vmatprep.subr.bf16.mxu0 0
    %629 = vmatpush1.bf16.msra.mxu0 %v489
    %630 = vmatprep.subr.bf16.mxu0 0
    %631 = vmatpush1.bf16.msra.mxu0 %v490
    %632 = vmatprep.subr.bf16.mxu0 0
    %633 = vmatpush1.bf16.msra.mxu0 %v491
    %634 = vmatprep.subr.bf16.mxu0 0
    %635 = vmatpush1.bf16.msra.mxu0 %v492
    %636 = vmatprep.subr.bf16.mxu0 0
    %637 = vmatpush1.bf16.msra.mxu0 %v493
    %638 = vmatprep.mubr.bf16.mxu0 %v202
    %639 = vmatmul.mubr.bf16.gmra.mrb[0].mxu0 %v188
    %v640 = vpop.f32.mrb[0].mxu0
    %v641 = vadd.f32 %v162, %v640
    %v642 = vpop.f32.mrb[0].mxu0
    %v643 = vpop.f32.mrb[0].mxu0
    %v644 = vpop.f32.mrb[0].mxu0
    %645 = vdwg.mxu0
    %646 = vmatprep.subr.bf16.mxu0 0
    %647 = vmatpush1.bf16.msra.mxu0 %v494
    %648 = vmatprep.subr.bf16.mxu0 0
    %649 = vmatpush1.bf16.msra.mxu0 %v495
    %650 = vmatprep.subr.bf16.mxu0 0
    %651 = vmatpush1.bf16.msra.mxu0 %v496
    %652 = vmatprep.subr.bf16.mxu0 0
    %653 = vmatpush1.bf16.msra.mxu0 %v497
    %654 = vmatprep.subr.bf16.mxu0 0
    %655 = vmatpush1.bf16.msra.mxu0 %v498
    %656 = vmatprep.subr.bf16.mxu0 0
    %657 = vmatpush1.bf16.msra.mxu0 %v499
    %658 = vmatprep.subr.bf16.mxu0 0
    %659 = vmatpush1.bf16.msra.mxu0 %v500
    %660 = vmatprep.subr.bf16.mxu0 0
    %661 = vmatpush1.bf16.msra.mxu0 %v501
    %662 = vmatprep.subr.bf16.mxu0 0
    %663 = vmatpush1.bf16.msra.mxu0 %v502
    %664 = vmatprep.subr.bf16.mxu0 0
    %665 = vmatpush1.bf16.msra.mxu0 %v503
    %666 = vmatprep.subr.bf16.mxu0 0
    %667 = vmatpush1.bf16.msra.mxu0 %v504
    %668 = vmatprep.subr.bf16.mxu0 0
    %669 = vmatpush1.bf16.msra.mxu0 %v505
    %670 = vmatprep.subr.bf16.mxu0 0
    %671 = vmatpush1.bf16.msra.mxu0 %v506
    %672 = vmatprep.subr.bf16.mxu0 0
    %673 = vmatpush1.bf16.msra.mxu0 %v507
    %674 = vmatprep.subr.bf16.mxu0 0
    %675 = vmatpush1.bf16.msra.mxu0 %v508
    %676 = vmatprep.subr.bf16.mxu0 0
    %677 = vmatpush1.bf16.msra.mxu0 %v509
    %678 = vmatprep.mubr.bf16.mxu0 %v212
    %679 = vmatmul.mubr.bf16.gmra.mrb[0].mxu0 %v210
    %v680 = vpop.f32.mrb[0].mxu0
    %v681 = vadd.f32 %v641, %v680
    %v682 = vpop.f32.mrb[0].mxu0
    %v683 = vpop.f32.mrb[0].mxu0
    %v684 = vpop.f32.mrb[0].mxu0
    %685 = vdwg.mxu0
    %686 = vmatprep.subr.bf16.mxu0 0
    %687 = vmatpush1.bf16.msra.mxu0 %v510
    %688 = vmatprep.subr.bf16.mxu0 0
    %689 = vmatpush1.bf16.msra.mxu0 %v511
    %690 = vmatprep.subr.bf16.mxu0 0
    %691 = vmatpush1.bf16.msra.mxu0 %v512
    %692 = vmatprep.subr.bf16.mxu0 0
    %693 = vmatpush1.bf16.msra.mxu0 %v513
    %694 = vmatprep.subr.bf16.mxu0 0
    %695 = vmatpush1.bf16.msra.mxu0 %v514
    %696 = vmatprep.subr.bf16.mxu0 0
    %697 = vmatpush1.bf16.msra.mxu0 %v515
    %698 = vmatprep.subr.bf16.mxu0 0
    %699 = vmatpush1.bf16.msra.mxu0 %v516
    %700 = vmatprep.subr.bf16.mxu0 0
    %701 = vmatpush1.bf16.msra.mxu0 %v517
    %702 = vmatprep.subr.bf16.mxu0 0
    %703 = vmatpush1.bf16.msra.mxu0 %v518
    %704 = vmatprep.subr.bf16.mxu0 0
    %705 = vmatpush1.bf16.msra.mxu0 %v519
    %706 = vmatprep.subr.bf16.mxu0 0
    %707 = vmatpush1.bf16.msra.mxu0 %v520
    %708 = vmatprep.subr.bf16.mxu0 0
    %709 = vmatpush1.bf16.msra.mxu0 %v521
    %710 = vmatprep.subr.bf16.mxu0 0
    %711 = vmatpush1.bf16.msra.mxu0 %v522
    %712 = vmatprep.subr.bf16.mxu0 0
    %713 = vmatpush1.bf16.msra.mxu0 %v523
    %714 = vmatprep.subr.bf16.mxu0 0
    %715 = vmatpush1.bf16.msra.mxu0 %v524
    %716 = vmatprep.subr.bf16.mxu0 0
    %717 = vmatpush1.bf16.msra.mxu0 %v525
    %718 = vmatprep.mubr.bf16.mxu0 %v209
    %719 = vmatmul.mubr.bf16.gmra.mrb[0].mxu0 %v195
    %v720 = vpop.f32.mrb[0].mxu0
    %v721 = vadd.f32 %v681, %v720
    %v722 = vpop.f32.mrb[0].mxu0
    %v723 = vpop.f32.mrb[0].mxu0
    %v724 = vpop.f32.mrb[0].mxu0
    %725 = vdwg.mxu0
    %726 = vmatprep.subr.bf16.mxu0 0
    %727 = vmatpush1.bf16.msra.mxu0 %v526
    %728 = vmatprep.subr.bf16.mxu0 0
    %729 = vmatpush1.bf16.msra.mxu0 %v527
    %730 = vmatprep.subr.bf16.mxu0 0
    %731 = vmatpush1.bf16.msra.mxu0 %v528
    %732 = vmatprep.subr.bf16.mxu0 0
    %733 = vmatpush1.bf16.msra.mxu0 %v529
    %734 = vmatprep.subr.bf16.mxu0 0
    %735 = vmatpush1.bf16.msra.mxu0 %v530
    %736 = vmatprep.subr.bf16.mxu0 0
    %737 = vmatpush1.bf16.msra.mxu0 %v531
    %738 = vmatprep.subr.bf16.mxu0 0
    %739 = vmatpush1.bf16.msra.mxu0 %v532
    %740 = vmatprep.subr.bf16.mxu0 0
    %741 = vmatpush1.bf16.msra.mxu0 %v533
    %742 = vmatprep.subr.bf16.mxu0 0
    %743 = vmatpush1.bf16.msra.mxu0 %v534
    %744 = vmatprep.subr.bf16.mxu0 0
    %745 = vmatpush1.bf16.msra.mxu0 %v535
    %746 = vmatprep.subr.bf16.mxu0 0
    %747 = vmatpush1.bf16.msra.mxu0 %v536
    %748 = vmatprep.subr.bf16.mxu0 0
    %749 = vmatpush1.bf16.msra.mxu0 %v537
    %750 = vmatprep.subr.bf16.mxu0 0
    %751 = vmatpush1.bf16.msra.mxu0 %v538
    %752 = vmatprep.subr.bf16.mxu0 0
    %753 = vmatpush1.bf16.msra.mxu0 %v539
    %754 = vmatprep.subr.bf16.mxu0 0
    %755 = vmatpush1.bf16.msra.mxu0 %v540
    %756 = vmatprep.subr.bf16.mxu0 0
    %757 = vmatpush1.bf16.msra.mxu0 %v541
    %758 = vmatprep.mubr.bf16.mxu0 %v213
    %759 = vmatmul.mubr.bf16.gmra.mrb[0].mxu0 %v211
    %v760 = vpop.f32.mrb[0].mxu0
    %v761 = vadd.f32 %v721, %v760
    %v762 = vpop.f32.mrb[0].mxu0
    %v763 = vpop.f32.mrb[0].mxu0
    %v764 = vpop.f32.mrb[0].mxu0
    %765 = vdwg.mxu0
    %v766 = vxor.u32 %v761, 2147483648
    %v767 = vmul.f32 %v766, 1.442695
    %v768 = vpow.pop %v767
    %v769 = vadd.f32 %v768, 1.0
    %v770 = vrcp.pop %v769
    %v771 = vmul.f32 1.0, %v770
    %v772 = vpack.c.bf16 %v771, %v771
    %v773 = vld [vmem:[%s3] sm:$0xf]
    %v774 = vld [vmem:[%s3 + $0x4] sm:$0xf]
    %v775 = vld [vmem:[%s3 + $0x8] sm:$0xf]
    %v776 = vld [vmem:[%s3 + $0xc] sm:$0xf]
    %v777 = vld [vmem:[%s3 + $0x10] sm:$0xf]
    %v778 = vld [vmem:[%s3 + $0x14] sm:$0xf]
    %v779 = vld [vmem:[%s3 + $0x18] sm:$0xf]
    %v780 = vld [vmem:[%s3 + $0x1c] sm:$0xf]
    %v781 = vld [vmem:[%s4] sm:$0x1]
    %v783 = vlaneseq
    %v784 = vshrl.u32 %v783, 7
    %v785 = vsub.s32 0, %v784
    %v786 = vrot.slane %v781, %v785
    %v796 = vunpack.c.l.b16 %v773
    %v797 = vunpack.c.l.b16 %v774
    %v798 = vunpack.c.l.b16 %v775
    %v799 = vunpack.c.l.b16 %v776
    %v800 = vunpack.c.l.b16 %v777
    %v801 = vunpack.c.l.b16 %v778
    %v802 = vunpack.c.l.b16 %v779
    %v803 = vunpack.c.l.b16 %v780
    %v804 = vpack.c.b16 %v797, %v796
    %v805 = vpack.c.b16 %v799, %v798
    %v806 = vpack.c.b16 %v801, %v800
    %v807 = vpack.c.b16 %v803, %v802
    %vm812 = vcmask 523264
    %v814 = vsel %vm812, %v772, 0
    %816 = vmatprep.subr.bf16.mxu0 0
    %817 = vmatpush1.bf16.msra.mxu0 %v804
    %818 = vmatprep.subr.bf16.mxu0 0
    %819 = vmatpush1.bf16.msra.mxu0 %v805
    %820 = vmatprep.subr.bf16.mxu0 0
    %821 = vmatpush1.bf16.msra.mxu0 %v806
    %822 = vmatprep.subr.bf16.mxu0 0
    %823 = vmatpush1.bf16.msra.mxu0 %v807
    %824 = vmatprep.subr.bf16.mxu0 0
    %825 = vmatpush1.bf16.msra.mxu0 0
    %826 = vmatprep.subr.bf16.mxu0 0
    %827 = vmatpush1.bf16.msra.mxu0 0
    %828 = vmatprep.subr.bf16.mxu0 0
    %829 = vmatpush1.bf16.msra.mxu0 0
    %830 = vmatprep.subr.bf16.mxu0 0
    %831 = vmatpush1.bf16.msra.mxu0 0
    %832 = vmatprep.subr.bf16.mxu0 0
    %833 = vmatpush1.bf16.msra.mxu0 0
    %834 = vmatprep.subr.bf16.mxu0 0
    %835 = vmatpush1.bf16.msra.mxu0 0
    %836 = vmatprep.subr.bf16.mxu0 0
    %837 = vmatpush1.bf16.msra.mxu0 0
    %838 = vmatprep.subr.bf16.mxu0 0
    %839 = vmatpush1.bf16.msra.mxu0 0
    %840 = vmatprep.subr.bf16.mxu0 0
    %841 = vmatpush1.bf16.msra.mxu0 0
    %842 = vmatprep.subr.bf16.mxu0 0
    %843 = vmatpush1.bf16.msra.mxu0 0
    %844 = vmatprep.subr.bf16.mxu0 0
    %845 = vmatpush1.bf16.msra.mxu0 0
    %846 = vmatprep.subr.bf16.mxu0 0
    %847 = vmatpush1.bf16.msra.mxu0 0
    %848 = vmatprep.mubr.bf16.mxu0 0
    %849 = vmatmul.mubr.bf16.gmra.mrb[0].mxu0 %v814
    %v850 = vpop.f32.mrb[0].mxu0
    %v851 = vadd.f32 %v786, %v850
    %v852 = vpop.f32.mrb[0].mxu0
    %v853 = vpop.f32.mrb[0].mxu0
    %v854 = vpop.f32.mrb[0].mxu0
    %855 = vdwg.mxu0
    %v856 = vxor.u32 %v851, 2147483648
    %v857 = vmul.f32 %v856, 1.442695
    %v858 = vpow.pop %v857
    %v859 = vadd.f32 %v858, 1.0
    %v860 = vrcp.pop %v859
    %v861 = vmul.f32 1.0, %v860
    %v862 = vpack.c.bf16 %v861, %v861
    %v863 = vld [vmem:[%s5] sm:$0xf]
    %v864 = vld [vmem:[%s5 + $0x4] sm:$0xf]
    %v865 = vld [vmem:[%s5 + $0x8] sm:$0xf]
    %v866 = vld [vmem:[%s5 + $0xc] sm:$0xf]
    %v867 = vld [vmem:[%s6] sm:$0x1]
    %v869 = vlaneseq
    %v870 = vshrl.u32 %v869, 7
    %v871 = vsub.s32 0, %v870
    %v872 = vrot.slane %v867, %v871
    %v878 = vunpack.c.l.b16 %v863
    %v879 = vunpack.c.l.b16 %v864
    %v880 = vunpack.c.l.b16 %v865
    %v881 = vunpack.c.l.b16 %v866
    %v882 = vpack.c.b16 %v879, %v878
    %v883 = vpack.c.b16 %v881, %v880
    %vm886 = vcmask 261120
    %v888 = vsel %vm886, %v862, 0
    %890 = vmatprep.subr.bf16.mxu0 0
    %891 = vmatpush1.bf16.msra.mxu0 %v882
    %892 = vmatprep.subr.bf16.mxu0 0
    %893 = vmatpush1.bf16.msra.mxu0 %v883
    %894 = vmatprep.subr.bf16.mxu0 0
    %895 = vmatpush1.bf16.msra.mxu0 0
    %896 = vmatprep.subr.bf16.mxu0 0
    %897 = vmatpush1.bf16.msra.mxu0 0
    %898 = vmatprep.subr.bf16.mxu0 0
    %899 = vmatpush1.bf16.msra.mxu0 0
    %900 = vmatprep.subr.bf16.mxu0 0
    %901 = vmatpush1.bf16.msra.mxu0 0
    %902 = vmatprep.subr.bf16.mxu0 0
    %903 = vmatpush1.bf16.msra.mxu0 0
    %904 = vmatprep.subr.bf16.mxu0 0
    %905 = vmatpush1.bf16.msra.mxu0 0
    %906 = vmatprep.subr.bf16.mxu0 0
    %907 = vmatpush1.bf16.msra.mxu0 0
    %908 = vmatprep.subr.bf16.mxu0 0
    %909 = vmatpush1.bf16.msra.mxu0 0
    %910 = vmatprep.subr.bf16.mxu0 0
    %911 = vmatpush1.bf16.msra.mxu0 0
    %912 = vmatprep.subr.bf16.mxu0 0
    %913 = vmatpush1.bf16.msra.mxu0 0
    %914 = vmatprep.subr.bf16.mxu0 0
    %915 = vmatpush1.bf16.msra.mxu0 0
    %916 = vmatprep.subr.bf16.mxu0 0
    %917 = vmatpush1.bf16.msra.mxu0 0
    %918 = vmatprep.subr.bf16.mxu0 0
    %919 = vmatpush1.bf16.msra.mxu0 0
    %920 = vmatprep.subr.bf16.mxu0 0
    %921 = vmatpush1.bf16.msra.mxu0 0
    %922 = vmatprep.mubr.bf16.mxu0 0
    %923 = vmatmul.mubr.bf16.gmra.mrb[0].mxu0 %v888
    %v924 = vpop.f32.mrb[0].mxu0
    %v925 = vadd.f32 %v872, %v924
    %v926 = vpop.f32.mrb[0].mxu0
    %v927 = vpop.f32.mrb[0].mxu0
    %v928 = vpop.f32.mrb[0].mxu0
    %929 = vdwg.mxu0
    %930 = vst [vmem:[#allocation2] sm:$0x3] %v925
    // Predicated region
    $region30: #{tpu_custom_call.1} parent=1 // pred_check
      _
    $region31: #{tpu_custom_call.1} parent=1 // pred_check_branch
      %932 = sbr.rel (0) target = $region33
    $region32: #{tpu_custom_call.1} parent=1 // pred_region
      %s934 = ssub.s32 32, 32
      %935 = vsyncadd [#allocation3], %s934
      %s937 = sshll.u32 [#allocation2], 4
      %s938 = int_to_ptr.vmem [resolvable:$true] %s937
      %940 = dma.vmem_to_hbm [thread:$0]  %s938, 32, %s7, [#allocation3]
    $region33: #{tpu_custom_call.1} parent=1 // pred_fallthru
      _
    // Predicated region
    $region34: #{tpu_custom_call.1} parent=1 // pred_check
      _
    $region35: #{tpu_custom_call.1} parent=1 // pred_check_branch
      %942 = sbr.rel (0) target = $region37
    $region36: #{tpu_custom_call.1} parent=1 // pred_region
      %943 = dma.done [#allocation3], 32
    $region37: #{tpu_custom_call.1} parent=1 // pred_fallthru
      _
    %944 = vsyncpa [#allocation3], 1

</llo_original>
